<compile_context>
chip_gen: v7x
topology: tpu7x:2x2x1
jax: 0.10.0
libtpu: 0.0.40
codegen_flags: <defaults>
</compile_context>

<pallas_src>
import functools

import jax
import jax.numpy as jnp
from jax.experimental import pallas as pl
from jax.experimental.pallas import tpu as pltpu


def _make_kernel(hw_total, bt, thw, ragged_hw):
    """Build the kernel with compile-time constants baked in."""

    def kernel(x_ref, w1_ref, w2_ref, o_ref, sum_acc, max_acc):
        # x_ref block: (BT, C, THW); w1: (C, Ch); w2: (Ch, C); o: (BT, C)
        s = pl.program_id(1)
        n_s = pl.num_programs(1)

        xb = x_ref[...].astype(jnp.float32)          # (BT, C, THW)

        if ragged_hw:
            # Mask out-of-range spatial columns on the (partial) last tile.
            col = jax.lax.broadcasted_iota(jnp.int32, xb.shape, dimension=2)
            valid = (s * thw + col) < hw_total
            x_sum = jnp.where(valid, xb, 0.0)
            x_max = jnp.where(valid, xb, -jnp.inf)
        else:
            x_sum = xb
            x_max = xb

        part_sum = jnp.sum(x_sum, axis=-1)           # (BT, C) lane-axis reduce
        part_max = jnp.max(x_max, axis=-1)           # (BT, C)

        @pl.when(s == 0)
        def _init():
            sum_acc[...] = part_sum
            max_acc[...] = part_max

        @pl.when(s != 0)
        def _accumulate():
            sum_acc[...] = sum_acc[...] + part_sum
            max_acc[...] = jnp.maximum(max_acc[...], part_max)

        @pl.when(s == n_s - 1)
        def _finalize():
            avg = sum_acc[...] * (1.0 / hw_total)    # mean applied once here
            mx = max_acc[...]
            stacked = jnp.concatenate([avg, mx], axis=0)   # (2*BT, C)
            w1 = w1_ref[...]                         # read weights only here
            w2 = w2_ref[...]
            h = jnp.maximum(
                jnp.dot(stacked, w1, preferred_element_type=jnp.float32), 0.0)
            y = jnp.dot(h, w2, preferred_element_type=jnp.float32)  # (2*BT, C)
            out = y[:bt] + y[bt:]                    # fc2(avg) + fc2(max)
            o_ref[...] = jax.nn.sigmoid(out).astype(o_ref.dtype)

    return kernel


def channel_attention(x_nchw, w1, w2, *, batch_tile=8,
                      vmem_tile_budget_bytes=8 << 20, thw=None):
    """x_nchw: (B, C, H, W); w1: (C, C//16); w2: (C//16, C).

    Returns sigmoid(fc2(relu(fc1(avg_pool)))+fc2(relu(fc1(max_pool)))) with
    shape (B, C, 1, 1), matching the PyTorch module.
    """
    B, C, H, W = x_nchw.shape
    HW = H * W
    Ch = w1.shape[1]

    BT = min(B, batch_tile)

    # Pick the spatial tile: largest multiple of 128 whose double-buffered
    # input block stays within the VMEM budget (works on v5e/v6e/v7x).
    if thw is None:
        if HW <= 128:
            thw = HW
        else:
            itemsize = jnp.dtype(x_nchw.dtype).itemsize
            max_thw = vmem_tile_budget_bytes // (2 * BT * C * itemsize)
            thw = min(HW, max(128, (max_thw // 128) * 128))
    ragged_hw = (HW % thw) != 0

    n_b = pl.cdiv(B, BT)
    n_hw = pl.cdiv(HW, thw)

    # Free reshape (merges trailing contiguous dims) -- no HBM transpose.
    x = x_nchw.reshape(B, C, HW)

    kernel = _make_kernel(HW, BT, thw, ragged_hw)

    out = pl.pallas_call(
        kernel,
        out_shape=jax.ShapeDtypeStruct((B, C), x.dtype),
        grid_spec=pltpu.PrefetchScalarGridSpec(
            num_scalar_prefetch=0,
            grid=(n_b, n_hw),
            in_specs=[
                pl.BlockSpec((BT, C, thw), lambda b, s: (b, 0, s)),
                pl.BlockSpec((C, Ch), lambda b, s: (0, 0)),
                pl.BlockSpec((Ch, C), lambda b, s: (0, 0)),
            ],
            out_specs=pl.BlockSpec((BT, C), lambda b, s: (b, 0)),
            scratch_shapes=[
                pltpu.VMEM((BT, C), jnp.float32),   # running sum
                pltpu.VMEM((BT, C), jnp.float32),   # running max
            ],
        ),
        compiler_params=pltpu.CompilerParams(
            dimension_semantics=("parallel", "arbitrary"),
            vmem_limit_bytes=32 * 1024 * 1024,
        ),
    )(x, w1, w2)

    return out.reshape(B, C, 1, 1)


def channel_attention_ref(x_nchw, w1, w2):
    # Pure-JAX reference for validation.
    avg = jnp.mean(x_nchw, axis=(2, 3))                    # (B, C)
    mx = jnp.max(x_nchw, axis=(2, 3))                      # (B, C)

    def mlp(v):
        return jnp.maximum(v @ w1, 0.0) @ w2

    out = jax.nn.sigmoid(mlp(avg) + mlp(mx))
    return out[:, :, None, None]


def _check(x, w1, w2, **kw):
    out = jax.block_until_ready(channel_attention(x, w1, w2, **kw))
    ref = channel_attention_ref(x, w1, w2)
    assert out.shape == ref.shape
    assert jnp.allclose(out, ref, atol=1e-5, rtol=1e-5)


if __name__ == "__main__":
    key = jax.random.PRNGKey(0)
    kx, k1, k2, kx2 = jax.random.split(key, 4)

    # in_planes=32 -> hidden = 32 // 16 = 2
    B, C, H, W = 8, 32, 16, 16
    Ch = C // 16

    x = jax.random.normal(kx, (B, C, H, W), dtype=jnp.float32)
    # Deterministic synthetic weights for fc1 (C -> C//16) and fc2 (C//16 -> C),
    # stored as (in, out) so the kernel does row-vector @ weight.
    w1 = jax.random.normal(k1, (C, Ch), dtype=jnp.float32) * 0.1
    w2 = jax.random.normal(k2, (Ch, C), dtype=jnp.float32) * 0.1

    # 1) Default tiling (whole HW fits in one tile here).
    _check(x, w1, w2)

    # 2) Force HW tiling (2 spatial steps) to exercise the accumulator path.
    _check(x, w1, w2, thw=128)

    # 3) Ragged HW (252 = 2 partial-aligned tiles of 128) exercises masking.
    x_ragged = jax.random.normal(kx2, (2, C, 18, 14), dtype=jnp.float32)
    _check(x_ragged, w1, w2, thw=128)

    print("KERNEL_OK")
</pallas_src>

<mosaic_0001>
module attributes {stable_mosaic.version = 11 : i64} {
  func.func @kernel(%arg0: i32, %arg1: i32, %arg2: memref<8x32x256xf32, #tpu.memory_space<vmem>>, %arg3: memref<32x2xf32, #tpu.memory_space<vmem>>, %arg4: memref<2x32xf32, #tpu.memory_space<vmem>>, %arg5: memref<8x32xf32, #tpu.memory_space<vmem>>, %arg6: memref<8x32xf32, #tpu.memory_space<vmem>>, %arg7: memref<8x32xf32, #tpu.memory_space<vmem>>) attributes {dimension_semantics = [#tpu.dimension_semantics<parallel>, #tpu.dimension_semantics<arbitrary>], iteration_bounds = array<i64: 1, 1>, scalar_prefetch = 0 : i64, scratch_operands = 2 : i64, tpu.core_type = #tpu.core_type<tc>, window_params = [{transform_indices = @transform_0, window_bounds = array<i64: 8, 32, 256>}, {pipeline_mode = #tpu.pipeline_mode<synchronous>, transform_indices = @transform_1, window_bounds = array<i64: 32, 2>}, {pipeline_mode = #tpu.pipeline_mode<synchronous>, transform_indices = @transform_2, window_bounds = array<i64: 2, 32>}, {transform_indices = @transform_3, window_bounds = array<i64: 8, 32>}]} {
    %c0 = arith.constant 0 : index
    %c0_0 = arith.constant 0 : index
    %c0_1 = arith.constant 0 : index
    %0 = vector.load %arg2[%c0, %c0_0, %c0_1] : memref<8x32x256xf32, #tpu.memory_space<vmem>>, vector<8x32x256xf32>
    %cst = arith.constant dense<0.000000e+00> : vector<8x32xf32>
    %1 = vector.multi_reduction <add>, %0, %cst [2] : vector<8x32x256xf32> to vector<8x32xf32>
    %cst_2 = arith.constant dense<0xFF800000> : vector<8x32xf32>
    %2 = vector.multi_reduction <maximumf>, %0, %cst_2 [2] : vector<8x32x256xf32> to vector<8x32xf32>
    %c0_i32 = arith.constant 0 : i32
    %3 = arith.cmpi eq, %arg1, %c0_i32 : i32
    %4 = arith.extui %3 : i1 to i32
    %c0_i32_3 = arith.constant 0 : i32
    %5 = arith.cmpi ne, %4, %c0_i32_3 : i32
    scf.if %5 {
      %c0_8 = arith.constant 0 : index
      %c0_9 = arith.constant 0 : index
      %12 = vector.load %arg6[%c0_8, %c0_9] : memref<8x32xf32, #tpu.memory_space<vmem>>, vector<8x32xf32>
      tpu.vector_store %arg6[%c0_8, %c0_9], %1 {strides = array<i32>} : memref<8x32xf32, #tpu.memory_space<vmem>>, vector<8x32xf32>,
      %c0_10 = arith.constant 0 : index
      %c0_11 = arith.constant 0 : index
      %13 = vector.load %arg7[%c0_10, %c0_11] : memref<8x32xf32, #tpu.memory_space<vmem>>, vector<8x32xf32>
      tpu.vector_store %arg7[%c0_10, %c0_11], %2 {strides = array<i32>} : memref<8x32xf32, #tpu.memory_space<vmem>>, vector<8x32xf32>,
    } else {
    }
    %c0_i32_4 = arith.constant 0 : i32
    %6 = arith.cmpi ne, %arg1, %c0_i32_4 : i32
    %7 = arith.extui %6 : i1 to i32
    %c0_i32_5 = arith.constant 0 : i32
    %8 = arith.cmpi ne, %7, %c0_i32_5 : i32
    scf.if %8 {
      %c0_8 = arith.constant 0 : index
      %c0_9 = arith.constant 0 : index
      %12 = vector.load %arg6[%c0_8, %c0_9] : memref<8x32xf32, #tpu.memory_space<vmem>>, vector<8x32xf32>
      %13 = arith.addf %12, %1 : vector<8x32xf32>
      %c0_10 = arith.constant 0 : index
      %c0_11 = arith.constant 0 : index
      %14 = vector.load %arg6[%c0_10, %c0_11] : memref<8x32xf32, #tpu.memory_space<vmem>>, vector<8x32xf32>
      tpu.vector_store %arg6[%c0_10, %c0_11], %13 {strides = array<i32>} : memref<8x32xf32, #tpu.memory_space<vmem>>, vector<8x32xf32>,
      %c0_12 = arith.constant 0 : index
      %c0_13 = arith.constant 0 : index
      %15 = vector.load %arg7[%c0_12, %c0_13] : memref<8x32xf32, #tpu.memory_space<vmem>>, vector<8x32xf32>
      %16 = arith.maximumf %15, %2 : vector<8x32xf32>
      %c0_14 = arith.constant 0 : index
      %c0_15 = arith.constant 0 : index
      %17 = vector.load %arg7[%c0_14, %c0_15] : memref<8x32xf32, #tpu.memory_space<vmem>>, vector<8x32xf32>
      tpu.vector_store %arg7[%c0_14, %c0_15], %16 {strides = array<i32>} : memref<8x32xf32, #tpu.memory_space<vmem>>, vector<8x32xf32>,
    } else {
    }
    %c0_i32_6 = arith.constant 0 : i32
    %9 = arith.cmpi eq, %arg1, %c0_i32_6 : i32
    %10 = arith.extui %9 : i1 to i32
    %c0_i32_7 = arith.constant 0 : i32
    %11 = arith.cmpi ne, %10, %c0_i32_7 : i32
    scf.if %11 {
      %c0_8 = arith.constant 0 : index
      %c0_9 = arith.constant 0 : index
      %12 = vector.load %arg6[%c0_8, %c0_9] : memref<8x32xf32, #tpu.memory_space<vmem>>, vector<8x32xf32>
      %cst_10 = arith.constant 3.906250e-03 : f32
      %13 = vector.broadcast %cst_10 : f32 to vector<8x32xf32>
      %14 = arith.mulf %12, %13 : vector<8x32xf32>
      %c0_11 = arith.constant 0 : index
      %c0_12 = arith.constant 0 : index
      %15 = vector.load %arg7[%c0_11, %c0_12] : memref<8x32xf32, #tpu.memory_space<vmem>>, vector<8x32xf32>
      %16 = tpu.concatenate %14, %15 in 0 : vector<8x32xf32>, vector<8x32xf32> -> vector<16x32xf32>
      %c0_13 = arith.constant 0 : index
      %c0_14 = arith.constant 0 : index
      %17 = vector.load %arg3[%c0_13, %c0_14] : memref<32x2xf32, #tpu.memory_space<vmem>>, vector<32x2xf32>
      %c0_15 = arith.constant 0 : index
      %c0_16 = arith.constant 0 : index
      %18 = vector.load %arg4[%c0_15, %c0_16] : memref<2x32xf32, #tpu.memory_space<vmem>>, vector<2x32xf32>
      %cst_17 = arith.constant dense<0.000000e+00> : vector<16x2xf32>
      %19 = tpu.matmul %16, %17, %cst_17 {dimension_numbers = #tpu.dot_dimension_numbers<[1], [0], [0], [1], [0, 0, 1, 1], [], []>} : vector<16x32xf32>, vector<32x2xf32>, vector<16x2xf32> -> vector<16x2xf32>
      %cst_18 = arith.constant 0.000000e+00 : f32
      %20 = vector.broadcast %cst_18 : f32 to vector<16x2xf32>
      %21 = arith.maximumf %19, %20 : vector<16x2xf32>
      %cst_19 = arith.constant dense<0.000000e+00> : vector<16x32xf32>
      %22 = tpu.matmul %21, %18, %cst_19 {dimension_numbers = #tpu.dot_dimension_numbers<[1], [0], [0], [1], [0, 0, 1, 1], [], []>} : vector<16x2xf32>, vector<2x32xf32>, vector<16x32xf32> -> vector<16x32xf32>
      %23 = vector.extract_strided_slice %22 {offsets = [0, 0], sizes = [8, 32], strides = [1, 1]} : vector<16x32xf32> to vector<8x32xf32>
      %24 = vector.extract_strided_slice %22 {offsets = [8, 0], sizes = [8, 32], strides = [1, 1]} : vector<16x32xf32> to vector<8x32xf32>
      %25 = arith.addf %23, %24 : vector<8x32xf32>
      %26 = arith.negf %25 : vector<8x32xf32>
      %27 = math.exp %26 : vector<8x32xf32>
      %cst_20 = arith.constant 1.000000e+00 : f32
      %28 = vector.broadcast %cst_20 : f32 to vector<8x32xf32>
      %29 = arith.addf %28, %27 : vector<8x32xf32>
      %30 = arith.divf %28, %29 : vector<8x32xf32>
      %c0_21 = arith.constant 0 : index
      %c0_22 = arith.constant 0 : index
      %31 = vector.load %arg5[%c0_21, %c0_22] : memref<8x32xf32, #tpu.memory_space<vmem>>, vector<8x32xf32>
      tpu.vector_store %arg5[%c0_21, %c0_22], %30 {strides = array<i32>} : memref<8x32xf32, #tpu.memory_space<vmem>>, vector<8x32xf32>,
    } else {
    }
    return
  }
  func.func @transform_0(%arg0: i32, %arg1: i32) -> (i32, i32, i32) {
    %c0_i32 = arith.constant 0 : i32
    %c0_i32_0 = arith.constant 0 : i32
    return %arg0, %c0_i32, %arg1 : i32, i32, i32
  }
  func.func @transform_1(%arg0: i32, %arg1: i32) -> (i32, i32) {
    %c0_i32 = arith.constant 0 : i32
    %c0_i32_0 = arith.constant 0 : i32
    %c0_i32_1 = arith.constant 0 : i32
    return %c0_i32, %c0_i32_0 : i32, i32
  }
  func.func @transform_2(%arg0: i32, %arg1: i32) -> (i32, i32) {
    %c0_i32 = arith.constant 0 : i32
    %c0_i32_0 = arith.constant 0 : i32
    %c0_i32_1 = arith.constant 0 : i32
    return %c0_i32, %c0_i32_0 : i32, i32
  }
  func.func @transform_3(%arg0: i32, %arg1: i32) -> (i32, i32) {
    %c0_i32 = arith.constant 0 : i32
    %c0_i32_0 = arith.constant 0 : i32
    return %arg0, %c0_i32 : i32, i32
  }
}

</mosaic_0001>

<llo_original>
// kernel: tpu_custom_call.1
$region0: #{tpu_custom_call.1}
  #allocation0 [shape = 'u32[]', space=smem, size = 0x4, offset = 0x4, fixed_abs, tag = 'smem constant byte address 0x4 - core index']
  #allocation1 [shape = 'u32[144,128]{1,0:T(1,128)}', space=vmem, size = 0x12000, scoped, tag = 'internal scratch']
  #allocation2 [shape = 'f32[8,32]{1,0:T(8,128)}', space=vmem, size = 0x1000, scoped, tag = 'scratch operand']
  #allocation3 [shape = 'f32[8,32]{1,0:T(8,128)}', space=vmem, size = 0x1000, scoped, tag = 'scratch operand']
  %s0 = inlined_call_operand.hbm [shape: f32[8,32,256], index: 0, kind: input, shape index: {}]
  %s1 = inlined_call_operand.vmem [shape: f32[32,2], index: 1, kind: input, shape index: {}]
  %s2 = inlined_call_operand.vmem [shape: f32[2,32], index: 2, kind: input, shape index: {}]
  %s3 = inlined_call_operand.hbm [shape: f32[8,32], index: 3, kind: output, shape index: {}]
  %s4 = sld [smem:[#allocation0]]
  $region38: #{tpu_custom_call.1} parent=0
    _
  %s6 = ssub.s32 1, %s4
  %s7 = scalar_select 0, %s6, %s4
  $region1: #{tpu_custom_call.1} parent=0
    #allocation4 [shape = 'u8[262144]{0}', space=vmem, size = 0x40000, scoped, tag = 'input window, operand 0, single buffered']
    #allocation5 [shape = 's32[1]{0}', space=sflag, size = 0x4, scoped, tag = 'scoped memory for tpu_custom_call.1']
    #allocation6 [shape = 's32[1]{0}', space=sflag, size = 0x4, scoped, tag = 'scoped memory for tpu_custom_call.1']
    #allocation7 [shape = 'u8[4096]{0}', space=vmem, size = 0x1000, scoped, tag = 'output window, operand 0, single buffered']
    %8 = vsyncpa [#allocation5], 0
    %9 = vsyncpa [#allocation6], 0
    // Predicated region
    $region2: #{tpu_custom_call.1} parent=1 // pred_check
      _
    $region3: #{tpu_custom_call.1} parent=1 // pred_check_branch
      %11 = sbr.rel (0) target = $region5
    $region4: #{tpu_custom_call.1} parent=1 // pred_region
      %s13 = ssub.s32 8192, 8192
      %14 = vsyncadd [#allocation5], %s13
      %s15 = sshll.u32 [#allocation4], 4
      %s16 = int_to_ptr.vmem [resolvable:$true] %s15
      %21 = dma.hbm_to_vmem [thread:$0]  %s0, 8192, %s16, [#allocation5], 256, 256, 16
    $region5: #{tpu_custom_call.1} parent=1 // pred_fallthru
      _
    // Predicated region
    $region6: #{tpu_custom_call.1} parent=1 // pred_check
      _
    $region7: #{tpu_custom_call.1} parent=1 // pred_check_branch
      %23 = sbr.rel (0) target = $region9
    $region8: #{tpu_custom_call.1} parent=1 // pred_region
      _
    $region9: #{tpu_custom_call.1} parent=1 // pred_fallthru
      _
    // Predicated region
    $region10: #{tpu_custom_call.1} parent=1 // pred_check
      _
    $region11: #{tpu_custom_call.1} parent=1 // pred_check_branch
      %25 = sbr.rel (0) target = $region13
    $region12: #{tpu_custom_call.1} parent=1 // pred_region
      _
    $region13: #{tpu_custom_call.1} parent=1 // pred_fallthru
      _
    // Predicated region
    $region14: #{tpu_custom_call.1} parent=1 // pred_check
      _
    $region15: #{tpu_custom_call.1} parent=1 // pred_check_branch
      %27 = sbr.rel (0) target = $region17
    $region16: #{tpu_custom_call.1} parent=1 // pred_region
      %28 = dma.done [#allocation5], 8192
    $region17: #{tpu_custom_call.1} parent=1 // pred_fallthru
      _
    %v29 = vld [vmem:[#allocation4] sm:$0xff]
    %v30 = vld [vmem:[#allocation4 + $0x8] sm:$0xff]
    %v31 = vld [vmem:[#allocation4 + $0x10] sm:$0xff]
    %v32 = vld [vmem:[#allocation4 + $0x18] sm:$0xff]
    %v33 = vld [vmem:[#allocation4 + $0x20] sm:$0xff]
    %v34 = vld [vmem:[#allocation4 + $0x28] sm:$0xff]
    %v35 = vld [vmem:[#allocation4 + $0x30] sm:$0xff]
    %v36 = vld [vmem:[#allocation4 + $0x38] sm:$0xff]
    %v37 = vld [vmem:[#allocation4 + $0x40] sm:$0xff]
    %v38 = vld [vmem:[#allocation4 + $0x48] sm:$0xff]
    %v39 = vld [vmem:[#allocation4 + $0x50] sm:$0xff]
    %v40 = vld [vmem:[#allocation4 + $0x58] sm:$0xff]
    %v41 = vld [vmem:[#allocation4 + $0x60] sm:$0xff]
    %v42 = vld [vmem:[#allocation4 + $0x68] sm:$0xff]
    %v43 = vld [vmem:[#allocation4 + $0x70] sm:$0xff]
    %v44 = vld [vmem:[#allocation4 + $0x78] sm:$0xff]
    %v45 = vld [vmem:[#allocation4 + $0x80] sm:$0xff]
    %v46 = vld [vmem:[#allocation4 + $0x88] sm:$0xff]
    %v47 = vld [vmem:[#allocation4 + $0x90] sm:$0xff]
    %v48 = vld [vmem:[#allocation4 + $0x98] sm:$0xff]
    %v49 = vld [vmem:[#allocation4 + $0xa0] sm:$0xff]
    %v50 = vld [vmem:[#allocation4 + $0xa8] sm:$0xff]
    %v51 = vld [vmem:[#allocation4 + $0xb0] sm:$0xff]
    %v52 = vld [vmem:[#allocation4 + $0xb8] sm:$0xff]
    %v53 = vld [vmem:[#allocation4 + $0xc0] sm:$0xff]
    %v54 = vld [vmem:[#allocation4 + $0xc8] sm:$0xff]
    %v55 = vld [vmem:[#allocation4 + $0xd0] sm:$0xff]
    %v56 = vld [vmem:[#allocation4 + $0xd8] sm:$0xff]
    %v57 = vld [vmem:[#allocation4 + $0xe0] sm:$0xff]
    %v58 = vld [vmem:[#allocation4 + $0xe8] sm:$0xff]
    %v59 = vld [vmem:[#allocation4 + $0xf0] sm:$0xff]
    %v60 = vld [vmem:[#allocation4 + $0xf8] sm:$0xff]
    %v61 = vld [vmem:[#allocation4 + $0x100] sm:$0xff]
    %v62 = vld [vmem:[#allocation4 + $0x108] sm:$0xff]
    %v63 = vld [vmem:[#allocation4 + $0x110] sm:$0xff]
    %v64 = vld [vmem:[#allocation4 + $0x118] sm:$0xff]
    %v65 = vld [vmem:[#allocation4 + $0x120] sm:$0xff]
    %v66 = vld [vmem:[#allocation4 + $0x128] sm:$0xff]
    %v67 = vld [vmem:[#allocation4 + $0x130] sm:$0xff]
    %v68 = vld [vmem:[#allocation4 + $0x138] sm:$0xff]
    %v69 = vld [vmem:[#allocation4 + $0x140] sm:$0xff]
    %v70 = vld [vmem:[#allocation4 + $0x148] sm:$0xff]
    %v71 = vld [vmem:[#allocation4 + $0x150] sm:$0xff]
    %v72 = vld [vmem:[#allocation4 + $0x158] sm:$0xff]
    %v73 = vld [vmem:[#allocation4 + $0x160] sm:$0xff]
    %v74 = vld [vmem:[#allocation4 + $0x168] sm:$0xff]
    %v75 = vld [vmem:[#allocation4 + $0x170] sm:$0xff]
    %v76 = vld [vmem:[#allocation4 + $0x178] sm:$0xff]
    %v77 = vld [vmem:[#allocation4 + $0x180] sm:$0xff]
    %v78 = vld [vmem:[#allocation4 + $0x188] sm:$0xff]
    %v79 = vld [vmem:[#allocation4 + $0x190] sm:$0xff]
    %v80 = vld [vmem:[#allocation4 + $0x198] sm:$0xff]
    %v81 = vld [vmem:[#allocation4 + $0x1a0] sm:$0xff]
    %v82 = vld [vmem:[#allocation4 + $0x1a8] sm:$0xff]
    %v83 = vld [vmem:[#allocation4 + $0x1b0] sm:$0xff]
    %v84 = vld [vmem:[#allocation4 + $0x1b8] sm:$0xff]
    %v85 = vld [vmem:[#allocation4 + $0x1c0] sm:$0xff]
    %v86 = vld [vmem:[#allocation4 + $0x1c8] sm:$0xff]
    %v87 = vld [vmem:[#allocation4 + $0x1d0] sm:$0xff]
    %v88 = vld [vmem:[#allocation4 + $0x1d8] sm:$0xff]
    %v89 = vld [vmem:[#allocation4 + $0x1e0] sm:$0xff]
    %v90 = vld [vmem:[#allocation4 + $0x1e8] sm:$0xff]
    %v91 = vld [vmem:[#allocation4 + $0x1f0] sm:$0xff]
    %v92 = vld [vmem:[#allocation4 + $0x1f8] sm:$0xff]
    %v93 = vadd.f32 %v29, %v30
    %94 = vadd.xlane.f32.xlu0 %v93
    %v95 = vpop.xlane.xlu0 %94
    %v96 = vadd.f32 %v31, %v32
    %97 = vadd.xlane.f32.xlu0 %v96
    %v98 = vpop.xlane.xlu0 %97
    %v99 = vadd.f32 %v33, %v34
    %100 = vadd.xlane.f32.xlu0 %v99
    %v101 = vpop.xlane.xlu0 %100
    %v102 = vadd.f32 %v35, %v36
    %103 = vadd.xlane.f32.xlu0 %v102
    %v104 = vpop.xlane.xlu0 %103
    %v105 = vadd.f32 %v37, %v38
    %106 = vadd.xlane.f32.xlu0 %v105
    %v107 = vpop.xlane.xlu0 %106
    %v108 = vadd.f32 %v39, %v40
    %109 = vadd.xlane.f32.xlu0 %v108
    %v110 = vpop.xlane.xlu0 %109
    %v111 = vadd.f32 %v41, %v42
    %112 = vadd.xlane.f32.xlu0 %v111
    %v113 = vpop.xlane.xlu0 %112
    %v114 = vadd.f32 %v43, %v44
    %115 = vadd.xlane.f32.xlu0 %v114
    %v116 = vpop.xlane.xlu0 %115
    %v117 = vadd.f32 %v45, %v46
    %118 = vadd.xlane.f32.xlu0 %v117
    %v119 = vpop.xlane.xlu0 %118
    %v120 = vadd.f32 %v47, %v48
    %121 = vadd.xlane.f32.xlu0 %v120
    %v122 = vpop.xlane.xlu0 %121
    %v123 = vadd.f32 %v49, %v50
    %124 = vadd.xlane.f32.xlu0 %v123
    %v125 = vpop.xlane.xlu0 %124
    %v126 = vadd.f32 %v51, %v52
    %127 = vadd.xlane.f32.xlu0 %v126
    %v128 = vpop.xlane.xlu0 %127
    %v129 = vadd.f32 %v53, %v54
    %130 = vadd.xlane.f32.xlu0 %v129
    %v131 = vpop.xlane.xlu0 %130
    %v132 = vadd.f32 %v55, %v56
    %133 = vadd.xlane.f32.xlu0 %v132
    %v134 = vpop.xlane.xlu0 %133
    %v135 = vadd.f32 %v57, %v58
    %136 = vadd.xlane.f32.xlu0 %v135
    %v137 = vpop.xlane.xlu0 %136
    %v138 = vadd.f32 %v59, %v60
    %139 = vadd.xlane.f32.xlu0 %v138
    %v140 = vpop.xlane.xlu0 %139
    %v141 = vadd.f32 %v61, %v62
    %142 = vadd.xlane.f32.xlu0 %v141
    %v143 = vpop.xlane.xlu0 %142
    %v144 = vadd.f32 %v63, %v64
    %145 = vadd.xlane.f32.xlu0 %v144
    %v146 = vpop.xlane.xlu0 %145
    %v147 = vadd.f32 %v65, %v66
    %148 = vadd.xlane.f32.xlu0 %v147
    %v149 = vpop.xlane.xlu0 %148
    %v150 = vadd.f32 %v67, %v68
    %151 = vadd.xlane.f32.xlu0 %v150
    %v152 = vpop.xlane.xlu0 %151
    %v153 = vadd.f32 %v69, %v70
    %154 = vadd.xlane.f32.xlu0 %v153
    %v155 = vpop.xlane.xlu0 %154
    %v156 = vadd.f32 %v71, %v72
    %157 = vadd.xlane.f32.xlu0 %v156
    %v158 = vpop.xlane.xlu0 %157
    %v159 = vadd.f32 %v73, %v74
    %160 = vadd.xlane.f32.xlu0 %v159
    %v161 = vpop.xlane.xlu0 %160
    %v162 = vadd.f32 %v75, %v76
    %163 = vadd.xlane.f32.xlu0 %v162
    %v164 = vpop.xlane.xlu0 %163
    %v165 = vadd.f32 %v77, %v78
    %166 = vadd.xlane.f32.xlu0 %v165
    %v167 = vpop.xlane.xlu0 %166
    %v168 = vadd.f32 %v79, %v80
    %169 = vadd.xlane.f32.xlu0 %v168
    %v170 = vpop.xlane.xlu0 %169
    %v171 = vadd.f32 %v81, %v82
    %172 = vadd.xlane.f32.xlu0 %v171
    %v173 = vpop.xlane.xlu0 %172
    %v174 = vadd.f32 %v83, %v84
    %175 = vadd.xlane.f32.xlu0 %v174
    %v176 = vpop.xlane.xlu0 %175
    %v177 = vadd.f32 %v85, %v86
    %178 = vadd.xlane.f32.xlu0 %v177
    %v179 = vpop.xlane.xlu0 %178
    %v180 = vadd.f32 %v87, %v88
    %181 = vadd.xlane.f32.xlu0 %v180
    %v182 = vpop.xlane.xlu0 %181
    %v183 = vadd.f32 %v89, %v90
    %184 = vadd.xlane.f32.xlu0 %v183
    %v185 = vpop.xlane.xlu0 %184
    %v186 = vadd.f32 %v91, %v92
    %187 = vadd.xlane.f32.xlu0 %v186
    %v188 = vpop.xlane.xlu0 %187
    %v189 = vmax.f32 %v29, %v30
    %190 = vmax.xlane.f32.xlu0 %v189
    %v191 = vpop.xlane.xlu0 %190
    %v192 = vmax.f32 %v31, %v32
    %193 = vmax.xlane.f32.xlu0 %v192
    %v194 = vpop.xlane.xlu0 %193
    %v195 = vmax.f32 %v33, %v34
    %196 = vmax.xlane.f32.xlu0 %v195
    %v197 = vpop.xlane.xlu0 %196
    %v198 = vmax.f32 %v35, %v36
    %199 = vmax.xlane.f32.xlu0 %v198
    %v200 = vpop.xlane.xlu0 %199
    %v201 = vmax.f32 %v37, %v38
    %202 = vmax.xlane.f32.xlu0 %v201
    %v203 = vpop.xlane.xlu0 %202
    %v204 = vmax.f32 %v39, %v40
    %205 = vmax.xlane.f32.xlu0 %v204
    %v206 = vpop.xlane.xlu0 %205
    %v207 = vmax.f32 %v41, %v42
    %208 = vmax.xlane.f32.xlu0 %v207
    %v209 = vpop.xlane.xlu0 %208
    %v210 = vmax.f32 %v43, %v44
    %211 = vmax.xlane.f32.xlu0 %v210
    %v212 = vpop.xlane.xlu0 %211
    %v213 = vmax.f32 %v45, %v46
    %214 = vmax.xlane.f32.xlu0 %v213
    %v215 = vpop.xlane.xlu0 %214
    %v216 = vmax.f32 %v47, %v48
    %217 = vmax.xlane.f32.xlu0 %v216
    %v218 = vpop.xlane.xlu0 %217
    %v219 = vmax.f32 %v49, %v50
    %220 = vmax.xlane.f32.xlu0 %v219
    %v221 = vpop.xlane.xlu0 %220
    %v222 = vmax.f32 %v51, %v52
    %223 = vmax.xlane.f32.xlu0 %v222
    %v224 = vpop.xlane.xlu0 %223
    %v225 = vmax.f32 %v53, %v54
    %226 = vmax.xlane.f32.xlu0 %v225
    %v227 = vpop.xlane.xlu0 %226
    %v228 = vmax.f32 %v55, %v56
    %229 = vmax.xlane.f32.xlu0 %v228
    %v230 = vpop.xlane.xlu0 %229
    %v231 = vmax.f32 %v57, %v58
    %232 = vmax.xlane.f32.xlu0 %v231
    %v233 = vpop.xlane.xlu0 %232
    %v234 = vmax.f32 %v59, %v60
    %235 = vmax.xlane.f32.xlu0 %v234
    %v236 = vpop.xlane.xlu0 %235
    %v237 = vmax.f32 %v61, %v62
    %238 = vmax.xlane.f32.xlu0 %v237
    %v239 = vpop.xlane.xlu0 %238
    %v240 = vmax.f32 %v63, %v64
    %241 = vmax.xlane.f32.xlu0 %v240
    %v242 = vpop.xlane.xlu0 %241
    %v243 = vmax.f32 %v65, %v66
    %244 = vmax.xlane.f32.xlu0 %v243
    %v245 = vpop.xlane.xlu0 %244
    %v246 = vmax.f32 %v67, %v68
    %247 = vmax.xlane.f32.xlu0 %v246
    %v248 = vpop.xlane.xlu0 %247
    %v249 = vmax.f32 %v69, %v70
    %250 = vmax.xlane.f32.xlu0 %v249
    %v251 = vpop.xlane.xlu0 %250
    %v252 = vmax.f32 %v71, %v72
    %253 = vmax.xlane.f32.xlu0 %v252
    %v254 = vpop.xlane.xlu0 %253
    %v255 = vmax.f32 %v73, %v74
    %256 = vmax.xlane.f32.xlu0 %v255
    %v257 = vpop.xlane.xlu0 %256
    %v258 = vmax.f32 %v75, %v76
    %259 = vmax.xlane.f32.xlu0 %v258
    %v260 = vpop.xlane.xlu0 %259
    %v261 = vmax.f32 %v77, %v78
    %262 = vmax.xlane.f32.xlu0 %v261
    %v263 = vpop.xlane.xlu0 %262
    %v264 = vmax.f32 %v79, %v80
    %265 = vmax.xlane.f32.xlu0 %v264
    %v266 = vpop.xlane.xlu0 %265
    %v267 = vmax.f32 %v81, %v82
    %268 = vmax.xlane.f32.xlu0 %v267
    %v269 = vpop.xlane.xlu0 %268
    %v270 = vmax.f32 %v83, %v84
    %271 = vmax.xlane.f32.xlu0 %v270
    %v272 = vpop.xlane.xlu0 %271
    %v273 = vmax.f32 %v85, %v86
    %274 = vmax.xlane.f32.xlu0 %v273
    %v275 = vpop.xlane.xlu0 %274
    %v276 = vmax.f32 %v87, %v88
    %277 = vmax.xlane.f32.xlu0 %v276
    %v278 = vpop.xlane.xlu0 %277
    %v279 = vmax.f32 %v89, %v90
    %280 = vmax.xlane.f32.xlu0 %v279
    %v281 = vpop.xlane.xlu0 %280
    %v282 = vmax.f32 %v91, %v92
    %283 = vmax.xlane.f32.xlu0 %v282
    %v284 = vpop.xlane.xlu0 %283
    %p285 = scmp.eq.s32.totalorder 0, 0
    // Predicated region
    $region18: #{tpu_custom_call.1} parent=1 // pred_check
      %p286 = pneg %p285
    $region19: #{tpu_custom_call.1} parent=1 // pred_check_branch
      %288 = sbr.rel (%p286) target = $region21
    $region20: #{tpu_custom_call.1} parent=1 // pred_region
      %v321 = vlaneseq
      %v322 = vand.u32 %v321, 127
      %v323 = vlaneseq
      %v324 = vshrl.u32 %v323, 7
      %v325 = vsub.s32 %v322, %v324
      %v326 = vrot.slane %v95, %v325
      %v327 = vadd.s32 %v322, 4294967288
      %v328 = vlaneseq
      %v329 = vshrl.u32 %v328, 7
      %v330 = vsub.s32 %v327, %v329
      %v331 = vrot.slane %v98, %v330
      %vm332 = vcmask 130112
      %v333 = vsel %vm332, %v331, %v326
      %v334 = vadd.s32 %v322, 4294967280
      %v335 = vlaneseq
      %v336 = vshrl.u32 %v335, 7
      %v337 = vsub.s32 %v334, %v336
      %v338 = vrot.slane %v101, %v337
      %vm339 = vcmask 195712
      %v340 = vsel %vm339, %v338, %v333
      %v341 = vadd.s32 %v322, 4294967272
      %v342 = vlaneseq
      %v343 = vshrl.u32 %v342, 7
      %v344 = vsub.s32 %v341, %v343
      %v345 = vrot.slane %v104, %v344
      %vm346 = vcmask 261312
      %v347 = vsel %vm346, %v345, %v340
      %v348 = vlaneseq
      %v349 = vshrl.u32 %v348, 7
      %v350 = vsub.s32 %v322, %v349
      %v351 = vrot.slane %v107, %v350
      %v352 = vlaneseq
      %v353 = vshrl.u32 %v352, 7
      %v354 = vsub.s32 %v327, %v353
      %v355 = vrot.slane %v110, %v354
      %v356 = vsel %vm332, %v355, %v351
      %v357 = vlaneseq
      %v358 = vshrl.u32 %v357, 7
      %v359 = vsub.s32 %v334, %v358
      %v360 = vrot.slane %v113, %v359
      %v361 = vsel %vm339, %v360, %v356
      %v362 = vlaneseq
      %v363 = vshrl.u32 %v362, 7
      %v364 = vsub.s32 %v341, %v363
      %v365 = vrot.slane %v116, %v364
      %v366 = vsel %vm346, %v365, %v361
      %v367 = vlaneseq
      %v368 = vshrl.u32 %v367, 7
      %v369 = vsub.s32 %v322, %v368
      %v370 = vrot.slane %v119, %v369
      %v371 = vlaneseq
      %v372 = vshrl.u32 %v371, 7
      %v373 = vsub.s32 %v327, %v372
      %v374 = vrot.slane %v122, %v373
      %v375 = vsel %vm332, %v374, %v370
      %v376 = vlaneseq
      %v377 = vshrl.u32 %v376, 7
      %v378 = vsub.s32 %v334, %v377
      %v379 = vrot.slane %v125, %v378
      %v380 = vsel %vm339, %v379, %v375
      %v381 = vlaneseq
      %v382 = vshrl.u32 %v381, 7
      %v383 = vsub.s32 %v341, %v382
      %v384 = vrot.slane %v128, %v383
      %v385 = vsel %vm346, %v384, %v380
      %v386 = vlaneseq
      %v387 = vshrl.u32 %v386, 7
      %v388 = vsub.s32 %v322, %v387
      %v389 = vrot.slane %v131, %v388
      %v390 = vlaneseq
      %v391 = vshrl.u32 %v390, 7
      %v392 = vsub.s32 %v327, %v391
      %v393 = vrot.slane %v134, %v392
      %v394 = vsel %vm332, %v393, %v389
      %v395 = vlaneseq
      %v396 = vshrl.u32 %v395, 7
      %v397 = vsub.s32 %v334, %v396
      %v398 = vrot.slane %v137, %v397
      %v399 = vsel %vm339, %v398, %v394
      %v400 = vlaneseq
      %v401 = vshrl.u32 %v400, 7
      %v402 = vsub.s32 %v341, %v401
      %v403 = vrot.slane %v140, %v402
      %v404 = vsel %vm346, %v403, %v399
      %v405 = vlaneseq
      %v406 = vshrl.u32 %v405, 7
      %v407 = vsub.s32 %v322, %v406
      %v408 = vrot.slane %v143, %v407
      %v409 = vlaneseq
      %v410 = vshrl.u32 %v409, 7
      %v411 = vsub.s32 %v327, %v410
      %v412 = vrot.slane %v146, %v411
      %v413 = vsel %vm332, %v412, %v408
      %v414 = vlaneseq
      %v415 = vshrl.u32 %v414, 7
      %v416 = vsub.s32 %v334, %v415
      %v417 = vrot.slane %v149, %v416
      %v418 = vsel %vm339, %v417, %v413
      %v419 = vlaneseq
      %v420 = vshrl.u32 %v419, 7
      %v421 = vsub.s32 %v341, %v420
      %v422 = vrot.slane %v152, %v421
      %v423 = vsel %vm346, %v422, %v418
      %v424 = vlaneseq
      %v425 = vshrl.u32 %v424, 7
      %v426 = vsub.s32 %v322, %v425
      %v427 = vrot.slane %v155, %v426
      %v428 = vlaneseq
      %v429 = vshrl.u32 %v428, 7
      %v430 = vsub.s32 %v327, %v429
      %v431 = vrot.slane %v158, %v430
      %v432 = vsel %vm332, %v431, %v427
      %v433 = vlaneseq
      %v434 = vshrl.u32 %v433, 7
      %v435 = vsub.s32 %v334, %v434
      %v436 = vrot.slane %v161, %v435
      %v437 = vsel %vm339, %v436, %v432
      %v438 = vlaneseq
      %v439 = vshrl.u32 %v438, 7
      %v440 = vsub.s32 %v341, %v439
      %v441 = vrot.slane %v164, %v440
      %v442 = vsel %vm346, %v441, %v437
      %v443 = vlaneseq
      %v444 = vshrl.u32 %v443, 7
      %v445 = vsub.s32 %v322, %v444
      %v446 = vrot.slane %v167, %v445
      %v447 = vlaneseq
      %v448 = vshrl.u32 %v447, 7
      %v449 = vsub.s32 %v327, %v448
      %v450 = vrot.slane %v170, %v449
      %v451 = vsel %vm332, %v450, %v446
      %v452 = vlaneseq
      %v453 = vshrl.u32 %v452, 7
      %v454 = vsub.s32 %v334, %v453
      %v455 = vrot.slane %v173, %v454
      %v456 = vsel %vm339, %v455, %v451
      %v457 = vlaneseq
      %v458 = vshrl.u32 %v457, 7
      %v459 = vsub.s32 %v341, %v458
      %v460 = vrot.slane %v176, %v459
      %v461 = vsel %vm346, %v460, %v456
      %v462 = vlaneseq
      %v463 = vshrl.u32 %v462, 7
      %v464 = vsub.s32 %v322, %v463
      %v465 = vrot.slane %v179, %v464
      %v466 = vlaneseq
      %v467 = vshrl.u32 %v466, 7
      %v468 = vsub.s32 %v327, %v467
      %v469 = vrot.slane %v182, %v468
      %v470 = vsel %vm332, %v469, %v465
      %v471 = vlaneseq
      %v472 = vshrl.u32 %v471, 7
      %v473 = vsub.s32 %v334, %v472
      %v474 = vrot.slane %v185, %v473
      %v475 = vsel %vm339, %v474, %v470
      %v476 = vlaneseq
      %v477 = vshrl.u32 %v476, 7
      %v478 = vsub.s32 %v341, %v477
      %v479 = vrot.slane %v188, %v478
      %v480 = vsel %vm346, %v479, %v475
      %vm481 = vcmask 1041409
      %v482 = vsel %vm481, %v366, %v347
      %vm483 = vcmask 1042434
      %v484 = vsel %vm483, %v385, %v482
      %vm485 = vcmask 1043459
      %v486 = vsel %vm485, %v404, %v484
      %vm487 = vcmask 1044484
      %v488 = vsel %vm487, %v423, %v486
      %vm489 = vcmask 1045509
      %v490 = vsel %vm489, %v442, %v488
      %vm491 = vcmask 1046534
      %v492 = vsel %vm491, %v461, %v490
      %vm493 = vcmask 1047559
      %v494 = vsel %vm493, %v480, %v492
      %vm496 = vcmask 261120
      %497 = vst.msk [vmem:[#allocation2] sm:$0xff] %vm496, %v494
      %v530 = vlaneseq
      %v531 = vshrl.u32 %v530, 7
      %v532 = vsub.s32 %v322, %v531
      %v533 = vrot.slane %v191, %v532
      %v534 = vlaneseq
      %v535 = vshrl.u32 %v534, 7
      %v536 = vsub.s32 %v327, %v535
      %v537 = vrot.slane %v194, %v536
      %v538 = vsel %vm332, %v537, %v533
      %v539 = vlaneseq
      %v540 = vshrl.u32 %v539, 7
      %v541 = vsub.s32 %v334, %v540
      %v542 = vrot.slane %v197, %v541
      %v543 = vsel %vm339, %v542, %v538
      %v544 = vlaneseq
      %v545 = vshrl.u32 %v544, 7
      %v546 = vsub.s32 %v341, %v545
      %v547 = vrot.slane %v200, %v546
      %v548 = vsel %vm346, %v547, %v543
      %v549 = vlaneseq
      %v550 = vshrl.u32 %v549, 7
      %v551 = vsub.s32 %v322, %v550
      %v552 = vrot.slane %v203, %v551
      %v553 = vlaneseq
      %v554 = vshrl.u32 %v553, 7
      %v555 = vsub.s32 %v327, %v554
      %v556 = vrot.slane %v206, %v555
      %v557 = vsel %vm332, %v556, %v552
      %v558 = vlaneseq
      %v559 = vshrl.u32 %v558, 7
      %v560 = vsub.s32 %v334, %v559
      %v561 = vrot.slane %v209, %v560
      %v562 = vsel %vm339, %v561, %v557
      %v563 = vlaneseq
      %v564 = vshrl.u32 %v563, 7
      %v565 = vsub.s32 %v341, %v564
      %v566 = vrot.slane %v212, %v565
      %v567 = vsel %vm346, %v566, %v562
      %v568 = vlaneseq
      %v569 = vshrl.u32 %v568, 7
      %v570 = vsub.s32 %v322, %v569
      %v571 = vrot.slane %v215, %v570
      %v572 = vlaneseq
      %v573 = vshrl.u32 %v572, 7
      %v574 = vsub.s32 %v327, %v573
      %v575 = vrot.slane %v218, %v574
      %v576 = vsel %vm332, %v575, %v571
      %v577 = vlaneseq
      %v578 = vshrl.u32 %v577, 7
      %v579 = vsub.s32 %v334, %v578
      %v580 = vrot.slane %v221, %v579
      %v581 = vsel %vm339, %v580, %v576
      %v582 = vlaneseq
      %v583 = vshrl.u32 %v582, 7
      %v584 = vsub.s32 %v341, %v583
      %v585 = vrot.slane %v224, %v584
      %v586 = vsel %vm346, %v585, %v581
      %v587 = vlaneseq
      %v588 = vshrl.u32 %v587, 7
      %v589 = vsub.s32 %v322, %v588
      %v590 = vrot.slane %v227, %v589
      %v591 = vlaneseq
      %v592 = vshrl.u32 %v591, 7
      %v593 = vsub.s32 %v327, %v592
      %v594 = vrot.slane %v230, %v593
      %v595 = vsel %vm332, %v594, %v590
      %v596 = vlaneseq
      %v597 = vshrl.u32 %v596, 7
      %v598 = vsub.s32 %v334, %v597
      %v599 = vrot.slane %v233, %v598
      %v600 = vsel %vm339, %v599, %v595
      %v601 = vlaneseq
      %v602 = vshrl.u32 %v601, 7
      %v603 = vsub.s32 %v341, %v602
      %v604 = vrot.slane %v236, %v603
      %v605 = vsel %vm346, %v604, %v600
      %v606 = vlaneseq
      %v607 = vshrl.u32 %v606, 7
      %v608 = vsub.s32 %v322, %v607
      %v609 = vrot.slane %v239, %v608
      %v610 = vlaneseq
      %v611 = vshrl.u32 %v610, 7
      %v612 = vsub.s32 %v327, %v611
      %v613 = vrot.slane %v242, %v612
      %v614 = vsel %vm332, %v613, %v609
      %v615 = vlaneseq
      %v616 = vshrl.u32 %v615, 7
      %v617 = vsub.s32 %v334, %v616
      %v618 = vrot.slane %v245, %v617
      %v619 = vsel %vm339, %v618, %v614
      %v620 = vlaneseq
      %v621 = vshrl.u32 %v620, 7
      %v622 = vsub.s32 %v341, %v621
      %v623 = vrot.slane %v248, %v622
      %v624 = vsel %vm346, %v623, %v619
      %v625 = vlaneseq
      %v626 = vshrl.u32 %v625, 7
      %v627 = vsub.s32 %v322, %v626
      %v628 = vrot.slane %v251, %v627
      %v629 = vlaneseq
      %v630 = vshrl.u32 %v629, 7
      %v631 = vsub.s32 %v327, %v630
      %v632 = vrot.slane %v254, %v631
      %v633 = vsel %vm332, %v632, %v628
      %v634 = vlaneseq
      %v635 = vshrl.u32 %v634, 7
      %v636 = vsub.s32 %v334, %v635
      %v637 = vrot.slane %v257, %v636
      %v638 = vsel %vm339, %v637, %v633
      %v639 = vlaneseq
      %v640 = vshrl.u32 %v639, 7
      %v641 = vsub.s32 %v341, %v640
      %v642 = vrot.slane %v260, %v641
      %v643 = vsel %vm346, %v642, %v638
      %v644 = vlaneseq
      %v645 = vshrl.u32 %v644, 7
      %v646 = vsub.s32 %v322, %v645
      %v647 = vrot.slane %v263, %v646
      %v648 = vlaneseq
      %v649 = vshrl.u32 %v648, 7
      %v650 = vsub.s32 %v327, %v649
      %v651 = vrot.slane %v266, %v650
      %v652 = vsel %vm332, %v651, %v647
      %v653 = vlaneseq
      %v654 = vshrl.u32 %v653, 7
      %v655 = vsub.s32 %v334, %v654
      %v656 = vrot.slane %v269, %v655
      %v657 = vsel %vm339, %v656, %v652
      %v658 = vlaneseq
      %v659 = vshrl.u32 %v658, 7
      %v660 = vsub.s32 %v341, %v659
      %v661 = vrot.slane %v272, %v660
      %v662 = vsel %vm346, %v661, %v657
      %v663 = vlaneseq
      %v664 = vshrl.u32 %v663, 7
      %v665 = vsub.s32 %v322, %v664
      %v666 = vrot.slane %v275, %v665
      %v667 = vlaneseq
      %v668 = vshrl.u32 %v667, 7
      %v669 = vsub.s32 %v327, %v668
      %v670 = vrot.slane %v278, %v669
      %v671 = vsel %vm332, %v670, %v666
      %v672 = vlaneseq
      %v673 = vshrl.u32 %v672, 7
      %v674 = vsub.s32 %v334, %v673
      %v675 = vrot.slane %v281, %v674
      %v676 = vsel %vm339, %v675, %v671
      %v677 = vlaneseq
      %v678 = vshrl.u32 %v677, 7
      %v679 = vsub.s32 %v341, %v678
      %v680 = vrot.slane %v284, %v679
      %v681 = vsel %vm346, %v680, %v676
      %v682 = vsel %vm481, %v567, %v548
      %v683 = vsel %vm483, %v586, %v682
      %v684 = vsel %vm485, %v605, %v683
      %v685 = vsel %vm487, %v624, %v684
      %v686 = vsel %vm489, %v643, %v685
      %v687 = vsel %vm491, %v662, %v686
      %v688 = vsel %vm493, %v681, %v687
      %690 = vst.msk [vmem:[#allocation3] sm:$0xff] %vm496, %v688
    $region21: #{tpu_custom_call.1} parent=1 // pred_fallthru
      _
    %p691 = scmp.ne.s32.totalorder 0, 0
    // Predicated region
    $region22: #{tpu_custom_call.1} parent=1 // pred_check
      %p692 = pneg %p691
    $region23: #{tpu_custom_call.1} parent=1 // pred_check_branch
      %694 = sbr.rel (%p692) target = $region25
    $region24: #{tpu_custom_call.1} parent=1 // pred_region
      %v695 = vld [vmem:[#allocation2] sm:$0xff]
      %v728 = vlaneseq
      %v729 = vand.u32 %v728, 127
      %v730 = vlaneseq
      %v731 = vshrl.u32 %v730, 7
      %v732 = vsub.s32 %v729, %v731
      %v733 = vrot.slane %v95, %v732
      %v734 = vadd.s32 %v729, 4294967288
      %v735 = vlaneseq
      %v736 = vshrl.u32 %v735, 7
      %v737 = vsub.s32 %v734, %v736
      %v738 = vrot.slane %v98, %v737
      %vm739 = vcmask 130112
      %v740 = vsel %vm739, %v738, %v733
      %v741 = vadd.s32 %v729, 4294967280
      %v742 = vlaneseq
      %v743 = vshrl.u32 %v742, 7
      %v744 = vsub.s32 %v741, %v743
      %v745 = vrot.slane %v101, %v744
      %vm746 = vcmask 195712
      %v747 = vsel %vm746, %v745, %v740
      %v748 = vadd.s32 %v729, 4294967272
      %v749 = vlaneseq
      %v750 = vshrl.u32 %v749, 7
      %v751 = vsub.s32 %v748, %v750
      %v752 = vrot.slane %v104, %v751
      %vm753 = vcmask 261312
      %v754 = vsel %vm753, %v752, %v747
      %v755 = vlaneseq
      %v756 = vshrl.u32 %v755, 7
      %v757 = vsub.s32 %v729, %v756
      %v758 = vrot.slane %v107, %v757
      %v759 = vlaneseq
      %v760 = vshrl.u32 %v759, 7
      %v761 = vsub.s32 %v734, %v760
      %v762 = vrot.slane %v110, %v761
      %v763 = vsel %vm739, %v762, %v758
      %v764 = vlaneseq
      %v765 = vshrl.u32 %v764, 7
      %v766 = vsub.s32 %v741, %v765
      %v767 = vrot.slane %v113, %v766
      %v768 = vsel %vm746, %v767, %v763
      %v769 = vlaneseq
      %v770 = vshrl.u32 %v769, 7
      %v771 = vsub.s32 %v748, %v770
      %v772 = vrot.slane %v116, %v771
      %v773 = vsel %vm753, %v772, %v768
      %v774 = vlaneseq
      %v775 = vshrl.u32 %v774, 7
      %v776 = vsub.s32 %v729, %v775
      %v777 = vrot.slane %v119, %v776
      %v778 = vlaneseq
      %v779 = vshrl.u32 %v778, 7
      %v780 = vsub.s32 %v734, %v779
      %v781 = vrot.slane %v122, %v780
      %v782 = vsel %vm739, %v781, %v777
      %v783 = vlaneseq
      %v784 = vshrl.u32 %v783, 7
      %v785 = vsub.s32 %v741, %v784
      %v786 = vrot.slane %v125, %v785
      %v787 = vsel %vm746, %v786, %v782
      %v788 = vlaneseq
      %v789 = vshrl.u32 %v788, 7
      %v790 = vsub.s32 %v748, %v789
      %v791 = vrot.slane %v128, %v790
      %v792 = vsel %vm753, %v791, %v787
      %v793 = vlaneseq
      %v794 = vshrl.u32 %v793, 7
      %v795 = vsub.s32 %v729, %v794
      %v796 = vrot.slane %v131, %v795
      %v797 = vlaneseq
      %v798 = vshrl.u32 %v797, 7
      %v799 = vsub.s32 %v734, %v798
      %v800 = vrot.slane %v134, %v799
      %v801 = vsel %vm739, %v800, %v796
      %v802 = vlaneseq
      %v803 = vshrl.u32 %v802, 7
      %v804 = vsub.s32 %v741, %v803
      %v805 = vrot.slane %v137, %v804
      %v806 = vsel %vm746, %v805, %v801
      %v807 = vlaneseq
      %v808 = vshrl.u32 %v807, 7
      %v809 = vsub.s32 %v748, %v808
      %v810 = vrot.slane %v140, %v809
      %v811 = vsel %vm753, %v810, %v806
      %v812 = vlaneseq
      %v813 = vshrl.u32 %v812, 7
      %v814 = vsub.s32 %v729, %v813
      %v815 = vrot.slane %v143, %v814
      %v816 = vlaneseq
      %v817 = vshrl.u32 %v816, 7
      %v818 = vsub.s32 %v734, %v817
      %v819 = vrot.slane %v146, %v818
      %v820 = vsel %vm739, %v819, %v815
      %v821 = vlaneseq
      %v822 = vshrl.u32 %v821, 7
      %v823 = vsub.s32 %v741, %v822
      %v824 = vrot.slane %v149, %v823
      %v825 = vsel %vm746, %v824, %v820
      %v826 = vlaneseq
      %v827 = vshrl.u32 %v826, 7
      %v828 = vsub.s32 %v748, %v827
      %v829 = vrot.slane %v152, %v828
      %v830 = vsel %vm753, %v829, %v825
      %v831 = vlaneseq
      %v832 = vshrl.u32 %v831, 7
      %v833 = vsub.s32 %v729, %v832
      %v834 = vrot.slane %v155, %v833
      %v835 = vlaneseq
      %v836 = vshrl.u32 %v835, 7
      %v837 = vsub.s32 %v734, %v836
      %v838 = vrot.slane %v158, %v837
      %v839 = vsel %vm739, %v838, %v834
      %v840 = vlaneseq
      %v841 = vshrl.u32 %v840, 7
      %v842 = vsub.s32 %v741, %v841
      %v843 = vrot.slane %v161, %v842
      %v844 = vsel %vm746, %v843, %v839
      %v845 = vlaneseq
      %v846 = vshrl.u32 %v845, 7
      %v847 = vsub.s32 %v748, %v846
      %v848 = vrot.slane %v164, %v847
      %v849 = vsel %vm753, %v848, %v844
      %v850 = vlaneseq
      %v851 = vshrl.u32 %v850, 7
      %v852 = vsub.s32 %v729, %v851
      %v853 = vrot.slane %v167, %v852
      %v854 = vlaneseq
      %v855 = vshrl.u32 %v854, 7
      %v856 = vsub.s32 %v734, %v855
      %v857 = vrot.slane %v170, %v856
      %v858 = vsel %vm739, %v857, %v853
      %v859 = vlaneseq
      %v860 = vshrl.u32 %v859, 7
      %v861 = vsub.s32 %v741, %v860
      %v862 = vrot.slane %v173, %v861
      %v863 = vsel %vm746, %v862, %v858
      %v864 = vlaneseq
      %v865 = vshrl.u32 %v864, 7
      %v866 = vsub.s32 %v748, %v865
      %v867 = vrot.slane %v176, %v866
      %v868 = vsel %vm753, %v867, %v863
      %v869 = vlaneseq
      %v870 = vshrl.u32 %v869, 7
      %v871 = vsub.s32 %v729, %v870
      %v872 = vrot.slane %v179, %v871
      %v873 = vlaneseq
      %v874 = vshrl.u32 %v873, 7
      %v875 = vsub.s32 %v734, %v874
      %v876 = vrot.slane %v182, %v875
      %v877 = vsel %vm739, %v876, %v872
      %v878 = vlaneseq
      %v879 = vshrl.u32 %v878, 7
      %v880 = vsub.s32 %v741, %v879
      %v881 = vrot.slane %v185, %v880
      %v882 = vsel %vm746, %v881, %v877
      %v883 = vlaneseq
      %v884 = vshrl.u32 %v883, 7
      %v885 = vsub.s32 %v748, %v884
      %v886 = vrot.slane %v188, %v885
      %v887 = vsel %vm753, %v886, %v882
      %vm888 = vcmask 1041409
      %v889 = vsel %vm888, %v773, %v754
      %vm890 = vcmask 1042434
      %v891 = vsel %vm890, %v792, %v889
      %vm892 = vcmask 1043459
      %v893 = vsel %vm892, %v811, %v891
      %vm894 = vcmask 1044484
      %v895 = vsel %vm894, %v830, %v893
      %vm896 = vcmask 1045509
      %v897 = vsel %vm896, %v849, %v895
      %vm898 = vcmask 1046534
      %v899 = vsel %vm898, %v868, %v897
      %vm900 = vcmask 1047559
      %v901 = vsel %vm900, %v887, %v899
      %v903 = vadd.f32 %v695, %v901
      %vm904 = vcmask 261120
      %905 = vst.msk [vmem:[#allocation2] sm:$0xff] %vm904, %v903
      %v906 = vld [vmem:[#allocation3] sm:$0xff]
      %v939 = vlaneseq
      %v940 = vshrl.u32 %v939, 7
      %v941 = vsub.s32 %v729, %v940
      %v942 = vrot.slane %v191, %v941
      %v943 = vlaneseq
      %v944 = vshrl.u32 %v943, 7
      %v945 = vsub.s32 %v734, %v944
      %v946 = vrot.slane %v194, %v945
      %v947 = vsel %vm739, %v946, %v942
      %v948 = vlaneseq
      %v949 = vshrl.u32 %v948, 7
      %v950 = vsub.s32 %v741, %v949
      %v951 = vrot.slane %v197, %v950
      %v952 = vsel %vm746, %v951, %v947
      %v953 = vlaneseq
      %v954 = vshrl.u32 %v953, 7
      %v955 = vsub.s32 %v748, %v954
      %v956 = vrot.slane %v200, %v955
      %v957 = vsel %vm753, %v956, %v952
      %v958 = vlaneseq
      %v959 = vshrl.u32 %v958, 7
      %v960 = vsub.s32 %v729, %v959
      %v961 = vrot.slane %v203, %v960
      %v962 = vlaneseq
      %v963 = vshrl.u32 %v962, 7
      %v964 = vsub.s32 %v734, %v963
      %v965 = vrot.slane %v206, %v964
      %v966 = vsel %vm739, %v965, %v961
      %v967 = vlaneseq
      %v968 = vshrl.u32 %v967, 7
      %v969 = vsub.s32 %v741, %v968
      %v970 = vrot.slane %v209, %v969
      %v971 = vsel %vm746, %v970, %v966
      %v972 = vlaneseq
      %v973 = vshrl.u32 %v972, 7
      %v974 = vsub.s32 %v748, %v973
      %v975 = vrot.slane %v212, %v974
      %v976 = vsel %vm753, %v975, %v971
      %v977 = vlaneseq
      %v978 = vshrl.u32 %v977, 7
      %v979 = vsub.s32 %v729, %v978
      %v980 = vrot.slane %v215, %v979
      %v981 = vlaneseq
      %v982 = vshrl.u32 %v981, 7
      %v983 = vsub.s32 %v734, %v982
      %v984 = vrot.slane %v218, %v983
      %v985 = vsel %vm739, %v984, %v980
      %v986 = vlaneseq
      %v987 = vshrl.u32 %v986, 7
      %v988 = vsub.s32 %v741, %v987
      %v989 = vrot.slane %v221, %v988
      %v990 = vsel %vm746, %v989, %v985
      %v991 = vlaneseq
      %v992 = vshrl.u32 %v991, 7
      %v993 = vsub.s32 %v748, %v992
      %v994 = vrot.slane %v224, %v993
      %v995 = vsel %vm753, %v994, %v990
      %v996 = vlaneseq
      %v997 = vshrl.u32 %v996, 7
      %v998 = vsub.s32 %v729, %v997
      %v999 = vrot.slane %v227, %v998
      %v1000 = vlaneseq
      %v1001 = vshrl.u32 %v1000, 7
      %v1002 = vsub.s32 %v734, %v1001
      %v1003 = vrot.slane %v230, %v1002
      %v1004 = vsel %vm739, %v1003, %v999
      %v1005 = vlaneseq
      %v1006 = vshrl.u32 %v1005, 7
      %v1007 = vsub.s32 %v741, %v1006
      %v1008 = vrot.slane %v233, %v1007
      %v1009 = vsel %vm746, %v1008, %v1004
      %v1010 = vlaneseq
      %v1011 = vshrl.u32 %v1010, 7
      %v1012 = vsub.s32 %v748, %v1011
      %v1013 = vrot.slane %v236, %v1012
      %v1014 = vsel %vm753, %v1013, %v1009
      %v1015 = vlaneseq
      %v1016 = vshrl.u32 %v1015, 7
      %v1017 = vsub.s32 %v729, %v1016
      %v1018 = vrot.slane %v239, %v1017
      %v1019 = vlaneseq
      %v1020 = vshrl.u32 %v1019, 7
      %v1021 = vsub.s32 %v734, %v1020
      %v1022 = vrot.slane %v242, %v1021
      %v1023 = vsel %vm739, %v1022, %v1018
      %v1024 = vlaneseq
      %v1025 = vshrl.u32 %v1024, 7
      %v1026 = vsub.s32 %v741, %v1025
      %v1027 = vrot.slane %v245, %v1026
      %v1028 = vsel %vm746, %v1027, %v1023
      %v1029 = vlaneseq
      %v1030 = vshrl.u32 %v1029, 7
      %v1031 = vsub.s32 %v748, %v1030
      %v1032 = vrot.slane %v248, %v1031
      %v1033 = vsel %vm753, %v1032, %v1028
      %v1034 = vlaneseq
      %v1035 = vshrl.u32 %v1034, 7
      %v1036 = vsub.s32 %v729, %v1035
      %v1037 = vrot.slane %v251, %v1036
      %v1038 = vlaneseq
      %v1039 = vshrl.u32 %v1038, 7
      %v1040 = vsub.s32 %v734, %v1039
      %v1041 = vrot.slane %v254, %v1040
      %v1042 = vsel %vm739, %v1041, %v1037
      %v1043 = vlaneseq
      %v1044 = vshrl.u32 %v1043, 7
      %v1045 = vsub.s32 %v741, %v1044
      %v1046 = vrot.slane %v257, %v1045
      %v1047 = vsel %vm746, %v1046, %v1042
      %v1048 = vlaneseq
      %v1049 = vshrl.u32 %v1048, 7
      %v1050 = vsub.s32 %v748, %v1049
      %v1051 = vrot.slane %v260, %v1050
      %v1052 = vsel %vm753, %v1051, %v1047
      %v1053 = vlaneseq
      %v1054 = vshrl.u32 %v1053, 7
      %v1055 = vsub.s32 %v729, %v1054
      %v1056 = vrot.slane %v263, %v1055
      %v1057 = vlaneseq
      %v1058 = vshrl.u32 %v1057, 7
      %v1059 = vsub.s32 %v734, %v1058
      %v1060 = vrot.slane %v266, %v1059
      %v1061 = vsel %vm739, %v1060, %v1056
      %v1062 = vlaneseq
      %v1063 = vshrl.u32 %v1062, 7
      %v1064 = vsub.s32 %v741, %v1063
      %v1065 = vrot.slane %v269, %v1064
      %v1066 = vsel %vm746, %v1065, %v1061
      %v1067 = vlaneseq
      %v1068 = vshrl.u32 %v1067, 7
      %v1069 = vsub.s32 %v748, %v1068
      %v1070 = vrot.slane %v272, %v1069
      %v1071 = vsel %vm753, %v1070, %v1066
      %v1072 = vlaneseq
      %v1073 = vshrl.u32 %v1072, 7
      %v1074 = vsub.s32 %v729, %v1073
      %v1075 = vrot.slane %v275, %v1074
      %v1076 = vlaneseq
      %v1077 = vshrl.u32 %v1076, 7
      %v1078 = vsub.s32 %v734, %v1077
      %v1079 = vrot.slane %v278, %v1078
      %v1080 = vsel %vm739, %v1079, %v1075
      %v1081 = vlaneseq
      %v1082 = vshrl.u32 %v1081, 7
      %v1083 = vsub.s32 %v741, %v1082
      %v1084 = vrot.slane %v281, %v1083
      %v1085 = vsel %vm746, %v1084, %v1080
      %v1086 = vlaneseq
      %v1087 = vshrl.u32 %v1086, 7
      %v1088 = vsub.s32 %v748, %v1087
      %v1089 = vrot.slane %v284, %v1088
      %v1090 = vsel %vm753, %v1089, %v1085
      %v1091 = vsel %vm888, %v976, %v957
      %v1092 = vsel %vm890, %v995, %v1091
      %v1093 = vsel %vm892, %v1014, %v1092
      %v1094 = vsel %vm894, %v1033, %v1093
      %v1095 = vsel %vm896, %v1052, %v1094
      %v1096 = vsel %vm898, %v1071, %v1095
      %v1097 = vsel %vm900, %v1090, %v1096
      %v1099 = vmax.f32 %v906, %v1097
      %1100 = vst.msk [vmem:[#allocation3] sm:$0xff] %vm904, %v1099
    $region25: #{tpu_custom_call.1} parent=1 // pred_fallthru
      _
    // Predicated region
    $region26: #{tpu_custom_call.1} parent=1 // pred_check
      %p1101 = pneg %p285
    $region27: #{tpu_custom_call.1} parent=1 // pred_check_branch
      %1103 = sbr.rel (%p1101) target = $region29
    $region28: #{tpu_custom_call.1} parent=1 // pred_region
      %v1104 = vld [vmem:[#allocation2] sm:$0xff]
      %v1105 = vmul.f32 %v1104, 0.00390625
      %v1106 = vld [vmem:[#allocation3] sm:$0xff]
      %v1107 = vld [vmem:[%s1] sm:$0xff]
      %v1108 = vld [vmem:[%s1 + $0x8] sm:$0xff]
      %v1109 = vld [vmem:[%s1 + $0x10] sm:$0xff]
      %v1110 = vld [vmem:[%s1 + $0x18] sm:$0xff]
      %v1111 = vld [vmem:[%s2] sm:$0x3]
      %vm1112 = vcmask 261120
      %v1114 = vsel %vm1112, %v1105, 0
      %v1117 = vsel %vm1112, %v1106, 0
      %1119 = vmatprep.subr.mxu0 0.0
      %1120 = vmatpush1.msra.mxu0 %v1107
      %1121 = vmatprep.subr.mxu0 0.0
      %1122 = vmatpush1.msra.mxu0 %v1108
      %1123 = vmatprep.subr.mxu0 0.0
      %1124 = vmatpush1.msra.mxu0 %v1109
      %1125 = vmatprep.subr.mxu0 0.0
      %1126 = vmatpush1.msra.mxu0 %v1110
      %1127 = vmatprep.subr.mxu0 0.0
      %1128 = vmatpush1.msra.mxu0 0.0
      %1129 = vmatprep.subr.mxu0 0.0
      %1130 = vmatpush1.msra.mxu0 0.0
      %1131 = vmatprep.subr.mxu0 0.0
      %1132 = vmatpush1.msra.mxu0 0.0
      %1133 = vmatprep.subr.mxu0 0.0
      %1134 = vmatpush1.msra.mxu0 0.0
      %1135 = vmatprep.subr.mxu0 0.0
      %1136 = vmatpush1.msra.mxu0 0.0
      %1137 = vmatprep.subr.mxu0 0.0
      %1138 = vmatpush1.msra.mxu0 0.0
      %1139 = vmatprep.subr.mxu0 0.0
      %1140 = vmatpush1.msra.mxu0 0.0
      %1141 = vmatprep.subr.mxu0 0.0
      %1142 = vmatpush1.msra.mxu0 0.0
      %1143 = vmatprep.subr.mxu0 0.0
      %1144 = vmatpush1.msra.mxu0 0.0
      %1145 = vmatprep.subr.mxu0 0.0
      %1146 = vmatpush1.msra.mxu0 0.0
      %1147 = vmatprep.subr.mxu0 0.0
      %1148 = vmatpush1.msra.mxu0 0.0
      %1149 = vmatprep.subr.mxu0 0.0
      %1150 = vmatpush1.msra.mxu0 0.0
      %1151 = vmatprep.subr.mxu0 0.0
      %1152 = vmatpush1.msra.mxu0 0.0
      %1153 = vmatprep.subr.mxu0 0.0
      %1154 = vmatpush1.msra.mxu0 0.0
      %1155 = vmatprep.subr.mxu0 0.0
      %1156 = vmatpush1.msra.mxu0 0.0
      %1157 = vmatprep.subr.mxu0 0.0
      %1158 = vmatpush1.msra.mxu0 0.0
      %1159 = vmatprep.subr.mxu0 0.0
      %1160 = vmatpush1.msra.mxu0 0.0
      %1161 = vmatprep.subr.mxu0 0.0
      %1162 = vmatpush1.msra.mxu0 0.0
      %1163 = vmatprep.subr.mxu0 0.0
      %1164 = vmatpush1.msra.mxu0 0.0
      %1165 = vmatprep.subr.mxu0 0.0
      %1166 = vmatpush1.msra.mxu0 0.0
      %1167 = vmatprep.subr.mxu0 0.0
      %1168 = vmatpush1.msra.mxu0 0.0
      %1169 = vmatprep.subr.mxu0 0.0
      %1170 = vmatpush1.msra.mxu0 0.0
      %1171 = vmatprep.subr.mxu0 0.0
      %1172 = vmatpush1.msra.mxu0 0.0
      %1173 = vmatprep.subr.mxu0 0.0
      %1174 = vmatpush1.msra.mxu0 0.0
      %1175 = vmatprep.subr.mxu0 0.0
      %1176 = vmatpush1.msra.mxu0 0.0
      %1177 = vmatprep.subr.mxu0 0.0
      %1178 = vmatpush1.msra.mxu0 0.0
      %1179 = vmatprep.subr.mxu0 0.0
      %1180 = vmatpush1.msra.mxu0 0.0
      %1181 = vmatprep.subr.mxu0 0.0
      %1182 = vmatpush1.msra.mxu0 0.0
      %1183 = vmatprep.mubr.f32.mxu0 0.0
      %1184 = vmatmul.mubr.f32.gmra.mrb[0].mxu0 %v1114
      %v1185 = vpop.f32.mrb[0].mxu0
      %v1186 = vadd.f32 0.0, %v1185
      %v1187 = vpop.f32.mrb[0].mxu0
      %1188 = vmatprep.mubr.f32.mxu0 0.0
      %1189 = vmatmul.mubr.f32.gmra.mrb[0].mxu0 %v1117
      %v1190 = vpop.f32.mrb[0].mxu0
      %v1191 = vadd.f32 0.0, %v1190
      %v1192 = vpop.f32.mrb[0].mxu0
      %1193 = vdwg.mxu0
      %v1194 = vmax.f32 %v1186, 0.0
      %v1195 = vmax.f32 %v1191, 0.0
      %vm1196 = vcmask 15360
      %v1198 = vsel %vm1196, %v1194, 0
      %v1201 = vsel %vm1196, %v1195, 0
      %vm1203 = vcmask 1041408
      %v1205 = vsel %vm1203, %v1111, 0
      %1207 = vmatprep.subr.mxu0 0.0
      %1208 = vmatpush1.msra.mxu0 %v1205
      %1209 = vmatprep.subr.mxu0 0.0
      %1210 = vmatpush1.msra.mxu0 0.0
      %1211 = vmatprep.subr.mxu0 0.0
      %1212 = vmatpush1.msra.mxu0 0.0
      %1213 = vmatprep.subr.mxu0 0.0
      %1214 = vmatpush1.msra.mxu0 0.0
      %1215 = vmatprep.subr.mxu0 0.0
      %1216 = vmatpush1.msra.mxu0 0.0
      %1217 = vmatprep.subr.mxu0 0.0
      %1218 = vmatpush1.msra.mxu0 0.0
      %1219 = vmatprep.subr.mxu0 0.0
      %1220 = vmatpush1.msra.mxu0 0.0
      %1221 = vmatprep.subr.mxu0 0.0
      %1222 = vmatpush1.msra.mxu0 0.0
      %1223 = vmatprep.subr.mxu0 0.0
      %1224 = vmatpush1.msra.mxu0 0.0
      %1225 = vmatprep.subr.mxu0 0.0
      %1226 = vmatpush1.msra.mxu0 0.0
      %1227 = vmatprep.subr.mxu0 0.0
      %1228 = vmatpush1.msra.mxu0 0.0
      %1229 = vmatprep.subr.mxu0 0.0
      %1230 = vmatpush1.msra.mxu0 0.0
      %1231 = vmatprep.subr.mxu0 0.0
      %1232 = vmatpush1.msra.mxu0 0.0
      %1233 = vmatprep.subr.mxu0 0.0
      %1234 = vmatpush1.msra.mxu0 0.0
      %1235 = vmatprep.subr.mxu0 0.0
      %1236 = vmatpush1.msra.mxu0 0.0
      %1237 = vmatprep.subr.mxu0 0.0
      %1238 = vmatpush1.msra.mxu0 0.0
      %1239 = vmatprep.subr.mxu0 0.0
      %1240 = vmatpush1.msra.mxu0 0.0
      %1241 = vmatprep.subr.mxu0 0.0
      %1242 = vmatpush1.msra.mxu0 0.0
      %1243 = vmatprep.subr.mxu0 0.0
      %1244 = vmatpush1.msra.mxu0 0.0
      %1245 = vmatprep.subr.mxu0 0.0
      %1246 = vmatpush1.msra.mxu0 0.0
      %1247 = vmatprep.subr.mxu0 0.0
      %1248 = vmatpush1.msra.mxu0 0.0
      %1249 = vmatprep.subr.mxu0 0.0
      %1250 = vmatpush1.msra.mxu0 0.0
      %1251 = vmatprep.subr.mxu0 0.0
      %1252 = vmatpush1.msra.mxu0 0.0
      %1253 = vmatprep.subr.mxu0 0.0
      %1254 = vmatpush1.msra.mxu0 0.0
      %1255 = vmatprep.subr.mxu0 0.0
      %1256 = vmatpush1.msra.mxu0 0.0
      %1257 = vmatprep.subr.mxu0 0.0
      %1258 = vmatpush1.msra.mxu0 0.0
      %1259 = vmatprep.subr.mxu0 0.0
      %1260 = vmatpush1.msra.mxu0 0.0
      %1261 = vmatprep.subr.mxu0 0.0
      %1262 = vmatpush1.msra.mxu0 0.0
      %1263 = vmatprep.subr.mxu0 0.0
      %1264 = vmatpush1.msra.mxu0 0.0
      %1265 = vmatprep.subr.mxu0 0.0
      %1266 = vmatpush1.msra.mxu0 0.0
      %1267 = vmatprep.subr.mxu0 0.0
      %1268 = vmatpush1.msra.mxu0 0.0
      %1269 = vmatprep.subr.mxu0 0.0
      %1270 = vmatpush1.msra.mxu0 0.0
      %1271 = vmatprep.mubr.f32.mxu0 0.0
      %1272 = vmatmul.mubr.f32.gmra.mrb[0].mxu0 %v1198
      %v1273 = vpop.f32.mrb[0].mxu0
      %v1274 = vadd.f32 0.0, %v1273
      %v1275 = vpop.f32.mrb[0].mxu0
      %1276 = vmatprep.mubr.f32.mxu0 0.0
      %1277 = vmatmul.mubr.f32.gmra.mrb[0].mxu0 %v1201
      %v1278 = vpop.f32.mrb[0].mxu0
      %v1279 = vadd.f32 0.0, %v1278
      %v1280 = vpop.f32.mrb[0].mxu0
      %1281 = vdwg.mxu0
      %v1282 = vadd.f32 %v1274, %v1279
      %v1283 = vxor.u32 %v1282, 2147483648
      %v1284 = vmul.f32 %v1283, 1.442695
      %v1285 = vpow.pop %v1284
      %v1286 = vadd.f32 %v1285, 1.0
      %v1287 = vrcp.pop %v1286
      %v1288 = vmul.f32 1.0, %v1287
      %1289 = vst.msk [vmem:[#allocation7] sm:$0xff] %vm1112, %v1288
    $region29: #{tpu_custom_call.1} parent=1 // pred_fallthru
      _
    // Predicated region
    $region30: #{tpu_custom_call.1} parent=1 // pred_check
      _
    $region31: #{tpu_custom_call.1} parent=1 // pred_check_branch
      %1291 = sbr.rel (0) target = $region33
    $region32: #{tpu_custom_call.1} parent=1 // pred_region
      %s1293 = ssub.s32 128, 128
      %1294 = vsyncadd [#allocation6], %s1293
      %s1296 = sshll.u32 [#allocation7], 4
      %s1297 = int_to_ptr.vmem [resolvable:$true] %s1296
      %1299 = dma.vmem_to_hbm [thread:$0]  %s1297, 128, %s3, [#allocation6]
    $region33: #{tpu_custom_call.1} parent=1 // pred_fallthru
      _
    // Predicated region
    $region34: #{tpu_custom_call.1} parent=1 // pred_check
      _
    $region35: #{tpu_custom_call.1} parent=1 // pred_check_branch
      %1301 = sbr.rel (0) target = $region37
    $region36: #{tpu_custom_call.1} parent=1 // pred_region
      %1302 = dma.done [#allocation6], 128
    $region37: #{tpu_custom_call.1} parent=1 // pred_fallthru
      _
    %1303 = vsyncpa [#allocation5], 1
    %1304 = vsyncpa [#allocation6], 1

</llo_original>
